<compile_context>
chip_gen: v6e
topology: v6e:2x2x1
jax: 0.10.0
libtpu: 0.0.40
codegen_flags: <defaults>
</compile_context>

<pallas_src>
import functools
import math

import jax
import jax.numpy as jnp
from jax.experimental import pallas as pl
from jax.experimental.pallas import tpu as pltpu

NEG_SLOPE = 0.2
H1 = 512
H2 = 256
OUT_PAD = 128        # final Linear has out_features=1; pad to a lane-dense 128
DEFAULT_TB = 256     # batch tile (rows per grid step)


def _round_up(x, m):
    return ((x + m - 1) // m) * m


def _leaky_relu(x, slope):
    return jnp.where(x > 0, x, slope * x)


def disc_kernel(x_ref, w1_ref, b1_ref, w2_ref, b2_ref, w3_ref, b3_ref, o_ref):
    # MXU matmuls in bf16 with f32 accumulation; bias add / LeakyReLU / sigmoid
    # in f32 on the VPU/EUP (no bf16 elementwise -> safe on v5e).
    x = x_ref[...].astype(jnp.bfloat16)

    h1 = jnp.dot(x, w1_ref[...], preferred_element_type=jnp.float32) + b1_ref[...]
    h1 = _leaky_relu(h1, NEG_SLOPE)

    h2 = jnp.dot(h1.astype(jnp.bfloat16), w2_ref[...],
                 preferred_element_type=jnp.float32) + b2_ref[...]
    h2 = _leaky_relu(h2, NEG_SLOPE)

    h3 = jnp.dot(h2.astype(jnp.bfloat16), w3_ref[...],
                 preferred_element_type=jnp.float32) + b3_ref[...]
    o_ref[...] = jax.nn.sigmoid(h3)


def prepare_params(params):
    """One-time conversion of (in,out)-layout Linear params into kernel layout:
    bf16 weights, f32 (1, N) bias rows, final layer padded to OUT_PAD lanes.
    Call once at init time, NOT in the training loop."""
    w1, b1, w2, b2, w3, b3 = params
    w3_p = jnp.zeros((H2, OUT_PAD), jnp.float32).at[:, :1].set(w3)
    b3_p = jnp.zeros((1, OUT_PAD), jnp.float32).at[:, :1].set(b3)
    return (
        w1.astype(jnp.bfloat16), b1.reshape(1, H1).astype(jnp.float32),
        w2.astype(jnp.bfloat16), b2.reshape(1, H2).astype(jnp.float32),
        w3_p.astype(jnp.bfloat16), b3_p.astype(jnp.float32),
    )


@jax.jit
def base_discriminator_forward(img, prepped):
    """img: (B, C, H, W) float. Returns validity scores (B, 1) in [0, 1]."""
    w1, b1, w2, b2, w3, b3 = prepped
    B = img.shape[0]
    in_dim = math.prod(img.shape[1:])          # static Python ints
    x = img.reshape(B, in_dim).astype(jnp.float32)

    # Batch tiling: pad B to a multiple of the tile (min multiple of 8 f32
    # sublanes); grid iterates batch tiles so weights are DMA'd once and the
    # next x tile prefetches while the current one computes.
    tb = min(DEFAULT_TB, _round_up(B, 8))
    b_pad = _round_up(B, tb)
    if b_pad != B:
        x = jnp.pad(x, ((0, b_pad - B), (0, 0)))
    nb = b_pad // tb

    flops = 2 * b_pad * (in_dim * H1 + H1 * H2 + H2 * OUT_PAD)
    bytes_accessed = (
        x.size * x.dtype.itemsize
        + sum(a.size * a.dtype.itemsize for a in (w1, b1, w2, b2, w3, b3))
        + b_pad * OUT_PAD * 4)
    cost = pl.CostEstimate(flops=flops,
                           transcendentals=b_pad * OUT_PAD,
                           bytes_accessed=bytes_accessed)

    out_padded = pl.pallas_call(
        disc_kernel,
        out_shape=jax.ShapeDtypeStruct((b_pad, OUT_PAD), jnp.float32),
        grid_spec=pltpu.PrefetchScalarGridSpec(
            num_scalar_prefetch=0,
            grid=(nb,),
            in_specs=[
                pl.BlockSpec((tb, in_dim), lambda i: (i, 0)),   # x: per-tile
                pl.BlockSpec((in_dim, H1), lambda i: (0, 0)),   # weights: resident
                pl.BlockSpec((1, H1), lambda i: (0, 0)),
                pl.BlockSpec((H1, H2), lambda i: (0, 0)),
                pl.BlockSpec((1, H2), lambda i: (0, 0)),
                pl.BlockSpec((H2, OUT_PAD), lambda i: (0, 0)),
                pl.BlockSpec((1, OUT_PAD), lambda i: (0, 0)),
            ],
            out_specs=pl.BlockSpec((tb, OUT_PAD), lambda i: (i, 0)),
        ),
        compiler_params=pltpu.CompilerParams(
            dimension_semantics=("parallel",)),
        cost_estimate=cost,
    )(x, w1, b1, w2, b2, w3, b3)

    return out_padded[:B, :1]


def init_params(key, in_dim):
    """Same shapes as the PyTorch module's Linear layers, stored (in, out)."""
    k1, k2, k3, k4, k5, k6 = jax.random.split(key, 6)
    s1 = 1.0 / math.sqrt(in_dim)
    s2 = 1.0 / math.sqrt(H1)
    s3 = 1.0 / math.sqrt(H2)
    w1 = jax.random.uniform(k1, (in_dim, H1), jnp.float32, -s1, s1)
    b1 = jax.random.uniform(k2, (H1,), jnp.float32, -s1, s1)
    w2 = jax.random.uniform(k3, (H1, H2), jnp.float32, -s2, s2)
    b2 = jax.random.uniform(k4, (H2,), jnp.float32, -s2, s2)
    w3 = jax.random.uniform(k5, (H2, 1), jnp.float32, -s3, s3)
    b3 = jax.random.uniform(k6, (1,), jnp.float32, -s3, s3)
    return (w1, b1, w2, b2, w3, b3)


def reference_forward_f32(img, params):
    """Pure-f32 JAX reference (matches the PyTorch module's math)."""
    w1, b1, w2, b2, w3, b3 = params
    x = img.reshape(img.shape[0], -1)
    h1 = x @ w1 + b1
    h1 = jnp.where(h1 > 0, h1, NEG_SLOPE * h1)
    h2 = h1 @ w2 + b2
    h2 = jnp.where(h2 > 0, h2, NEG_SLOPE * h2)
    return jax.nn.sigmoid(h2 @ w3 + b3)


def reference_forward_bf16(img, params):
    """Mirrors the kernel's numerics: bf16 matmul inputs, f32 accumulation."""
    w1, b1, w2, b2, w3, b3 = params
    x = img.reshape(img.shape[0], -1).astype(jnp.bfloat16)
    h1 = jnp.dot(x, w1.astype(jnp.bfloat16),
                 preferred_element_type=jnp.float32) + b1
    h1 = jnp.where(h1 > 0, h1, NEG_SLOPE * h1)
    h2 = jnp.dot(h1.astype(jnp.bfloat16), w2.astype(jnp.bfloat16),
                 preferred_element_type=jnp.float32) + b2
    h2 = jnp.where(h2 > 0, h2, NEG_SLOPE * h2)
    h3 = jnp.dot(h2.astype(jnp.bfloat16), w3.astype(jnp.bfloat16),
                 preferred_element_type=jnp.float32) + b3
    return jax.nn.sigmoid(h3)


if __name__ == "__main__":
    # img_shape = (C, H, W) = (1, 16, 16)  ->  in_dim = 256
    B, C, H, W = 2, 1, 16, 16
    in_dim = C * H * W

    key = jax.random.PRNGKey(0)
    k_img, k_par = jax.random.split(key)
    img = jax.random.normal(k_img, (B, C, H, W), jnp.float32)
    params = init_params(k_par, in_dim)

    prepped = prepare_params(params)          # one-time param conversion
    out = base_discriminator_forward(img, prepped)
    out = jax.block_until_ready(out)

    assert out.shape == (B, 1), out.shape
    # Tight check against a reference with identical bf16-matmul numerics.
    ref_bf16 = reference_forward_bf16(img, params)
    assert jnp.allclose(out, ref_bf16, atol=2e-3), (out, ref_bf16)
    # Loose check against the pure-f32 module semantics.
    ref_f32 = reference_forward_f32(img, params)
    assert jnp.allclose(out, ref_f32, atol=3e-2), (out, ref_f32)

    print("KERNEL_OK")
</pallas_src>

<mosaic_0001>
module attributes {stable_mosaic.version = 11 : i64} {
  func.func @disc_kernel(%arg0: i32, %arg1: memref<8x256xf32, #tpu.memory_space<vmem>>, %arg2: memref<256x512xbf16, #tpu.memory_space<vmem>>, %arg3: memref<1x512xf32, #tpu.memory_space<vmem>>, %arg4: memref<512x256xbf16, #tpu.memory_space<vmem>>, %arg5: memref<1x256xf32, #tpu.memory_space<vmem>>, %arg6: memref<256x128xbf16, #tpu.memory_space<vmem>>, %arg7: memref<1x128xf32, #tpu.memory_space<vmem>>, %arg8: memref<8x128xf32, #tpu.memory_space<vmem>>) attributes {dimension_semantics = [#tpu.dimension_semantics<parallel>], iteration_bounds = array<i64: 1>, scalar_prefetch = 0 : i64, scratch_operands = 0 : i64, tpu.core_type = #tpu.core_type<tc>, window_params = [{transform_indices = @transform_0, window_bounds = array<i64: 8, 256>}, {pipeline_mode = #tpu.pipeline_mode<synchronous>, transform_indices = @transform_1, window_bounds = array<i64: 256, 512>}, {pipeline_mode = #tpu.pipeline_mode<synchronous>, transform_indices = @transform_2, window_bounds = array<i64: 1, 512>}, {pipeline_mode = #tpu.pipeline_mode<synchronous>, transform_indices = @transform_3, window_bounds = array<i64: 512, 256>}, {pipeline_mode = #tpu.pipeline_mode<synchronous>, transform_indices = @transform_4, window_bounds = array<i64: 1, 256>}, {pipeline_mode = #tpu.pipeline_mode<synchronous>, transform_indices = @transform_5, window_bounds = array<i64: 256, 128>}, {pipeline_mode = #tpu.pipeline_mode<synchronous>, transform_indices = @transform_6, window_bounds = array<i64: 1, 128>}, {transform_indices = @transform_7, window_bounds = array<i64: 8, 128>}]} {
    %c0 = arith.constant 0 : index
    %c0_0 = arith.constant 0 : index
    %0 = vector.load %arg1[%c0, %c0_0] : memref<8x256xf32, #tpu.memory_space<vmem>>, vector<8x256xf32>
    %1 = arith.truncf %0 : vector<8x256xf32> to vector<8x256xbf16>
    %c0_1 = arith.constant 0 : index
    %c0_2 = arith.constant 0 : index
    %2 = vector.load %arg2[%c0_1, %c0_2] : memref<256x512xbf16, #tpu.memory_space<vmem>>, vector<256x512xbf16>
    %cst = arith.constant dense<0.000000e+00> : vector<8x512xf32>
    %3 = tpu.matmul %1, %2, %cst {dimension_numbers = #tpu.dot_dimension_numbers<[1], [0], [0], [1], [0, 0, 1, 1], [], []>} : vector<8x256xbf16>, vector<256x512xbf16>, vector<8x512xf32> -> vector<8x512xf32>
    %c0_3 = arith.constant 0 : index
    %c0_4 = arith.constant 0 : index
    %4 = vector.load %arg3[%c0_3, %c0_4] : memref<1x512xf32, #tpu.memory_space<vmem>>, vector<1x512xf32>
    %5 = vector.broadcast %4 : vector<1x512xf32> to vector<8x512xf32>
    %6 = arith.addf %3, %5 : vector<8x512xf32>
    %cst_5 = arith.constant 0.000000e+00 : f32
    %7 = vector.broadcast %cst_5 : f32 to vector<8x512xf32>
    %8 = arith.cmpf ogt, %6, %7 : vector<8x512xf32>
    %cst_6 = arith.constant 2.000000e-01 : f32
    %9 = vector.broadcast %cst_6 : f32 to vector<8x512xf32>
    %10 = arith.mulf %9, %6 : vector<8x512xf32>
    %11 = arith.select %8, %6, %10 : vector<8x512xi1>, vector<8x512xf32>
    %12 = arith.truncf %11 : vector<8x512xf32> to vector<8x512xbf16>
    %c0_7 = arith.constant 0 : index
    %c0_8 = arith.constant 0 : index
    %13 = vector.load %arg4[%c0_7, %c0_8] : memref<512x256xbf16, #tpu.memory_space<vmem>>, vector<512x256xbf16>
    %cst_9 = arith.constant dense<0.000000e+00> : vector<8x256xf32>
    %14 = tpu.matmul %12, %13, %cst_9 {dimension_numbers = #tpu.dot_dimension_numbers<[1], [0], [0], [1], [0, 0, 1, 1], [], []>} : vector<8x512xbf16>, vector<512x256xbf16>, vector<8x256xf32> -> vector<8x256xf32>
    %c0_10 = arith.constant 0 : index
    %c0_11 = arith.constant 0 : index
    %15 = vector.load %arg5[%c0_10, %c0_11] : memref<1x256xf32, #tpu.memory_space<vmem>>, vector<1x256xf32>
    %16 = vector.broadcast %15 : vector<1x256xf32> to vector<8x256xf32>
    %17 = arith.addf %14, %16 : vector<8x256xf32>
    %cst_12 = arith.constant 0.000000e+00 : f32
    %18 = vector.broadcast %cst_12 : f32 to vector<8x256xf32>
    %19 = arith.cmpf ogt, %17, %18 : vector<8x256xf32>
    %cst_13 = arith.constant 2.000000e-01 : f32
    %20 = vector.broadcast %cst_13 : f32 to vector<8x256xf32>
    %21 = arith.mulf %20, %17 : vector<8x256xf32>
    %22 = arith.select %19, %17, %21 : vector<8x256xi1>, vector<8x256xf32>
    %23 = arith.truncf %22 : vector<8x256xf32> to vector<8x256xbf16>
    %c0_14 = arith.constant 0 : index
    %c0_15 = arith.constant 0 : index
    %24 = vector.load %arg6[%c0_14, %c0_15] : memref<256x128xbf16, #tpu.memory_space<vmem>>, vector<256x128xbf16>
    %cst_16 = arith.constant dense<0.000000e+00> : vector<8x128xf32>
    %25 = tpu.matmul %23, %24, %cst_16 {dimension_numbers = #tpu.dot_dimension_numbers<[1], [0], [0], [1], [0, 0, 1, 1], [], []>} : vector<8x256xbf16>, vector<256x128xbf16>, vector<8x128xf32> -> vector<8x128xf32>
    %c0_17 = arith.constant 0 : index
    %c0_18 = arith.constant 0 : index
    %26 = vector.load %arg7[%c0_17, %c0_18] : memref<1x128xf32, #tpu.memory_space<vmem>>, vector<1x128xf32>
    %27 = vector.broadcast %26 : vector<1x128xf32> to vector<8x128xf32>
    %28 = arith.addf %25, %27 : vector<8x128xf32>
    %29 = arith.negf %28 : vector<8x128xf32>
    %30 = math.exp %29 : vector<8x128xf32>
    %cst_19 = arith.constant 1.000000e+00 : f32
    %31 = vector.broadcast %cst_19 : f32 to vector<8x128xf32>
    %32 = arith.addf %31, %30 : vector<8x128xf32>
    %33 = arith.divf %31, %32 : vector<8x128xf32>
    %c0_20 = arith.constant 0 : index
    %c0_21 = arith.constant 0 : index
    %34 = vector.load %arg8[%c0_20, %c0_21] : memref<8x128xf32, #tpu.memory_space<vmem>>, vector<8x128xf32>
    tpu.vector_store %arg8[%c0_20, %c0_21], %33 {strides = array<i32>} : memref<8x128xf32, #tpu.memory_space<vmem>>, vector<8x128xf32>,
    return
  }
  func.func @transform_0(%arg0: i32) -> (i32, i32) {
    %c0_i32 = arith.constant 0 : i32
    %c0_i32_0 = arith.constant 0 : i32
    return %arg0, %c0_i32 : i32, i32
  }
  func.func @transform_1(%arg0: i32) -> (i32, i32) {
    %c0_i32 = arith.constant 0 : i32
    %c0_i32_0 = arith.constant 0 : i32
    %c0_i32_1 = arith.constant 0 : i32
    return %c0_i32, %c0_i32_0 : i32, i32
  }
  func.func @transform_2(%arg0: i32) -> (i32, i32) {
    %c0_i32 = arith.constant 0 : i32
    %c0_i32_0 = arith.constant 0 : i32
    %c0_i32_1 = arith.constant 0 : i32
    return %c0_i32, %c0_i32_0 : i32, i32
  }
  func.func @transform_3(%arg0: i32) -> (i32, i32) {
    %c0_i32 = arith.constant 0 : i32
    %c0_i32_0 = arith.constant 0 : i32
    %c0_i32_1 = arith.constant 0 : i32
    return %c0_i32, %c0_i32_0 : i32, i32
  }
  func.func @transform_4(%arg0: i32) -> (i32, i32) {
    %c0_i32 = arith.constant 0 : i32
    %c0_i32_0 = arith.constant 0 : i32
    %c0_i32_1 = arith.constant 0 : i32
    return %c0_i32, %c0_i32_0 : i32, i32
  }
  func.func @transform_5(%arg0: i32) -> (i32, i32) {
    %c0_i32 = arith.constant 0 : i32
    %c0_i32_0 = arith.constant 0 : i32
    %c0_i32_1 = arith.constant 0 : i32
    return %c0_i32, %c0_i32_0 : i32, i32
  }
  func.func @transform_6(%arg0: i32) -> (i32, i32) {
    %c0_i32 = arith.constant 0 : i32
    %c0_i32_0 = arith.constant 0 : i32
    %c0_i32_1 = arith.constant 0 : i32
    return %c0_i32, %c0_i32_0 : i32, i32
  }
  func.func @transform_7(%arg0: i32) -> (i32, i32) {
    %c0_i32 = arith.constant 0 : i32
    %c0_i32_0 = arith.constant 0 : i32
    return %arg0, %c0_i32 : i32, i32
  }
}

</mosaic_0001>

<llo_original>
// kernel: base_discriminator_forward.1
$region0: #{base_discriminator_forward.1}
  #allocation0 [shape = 'u32[]', space=smem, size = 0x4, offset = 0x4, fixed_abs, tag = 'smem constant byte address 0x4 - core index']
  #allocation1 [shape = 'u32[144,128]{1,0:T(1,128)}', space=vmem, size = 0x12000, scoped, tag = 'internal scratch']
  %s0 = inlined_call_operand.vmem [shape: f32[8,256], index: 0, kind: input, shape index: {}]
  %s1 = inlined_call_operand.hbm [shape: bf16[256,512], index: 1, kind: input, shape index: {}]
  %s2 = inlined_call_operand.vmem [shape: f32[1,512], index: 2, kind: input, shape index: {}]
  %s3 = inlined_call_operand.hbm [shape: bf16[512,256], index: 3, kind: input, shape index: {}]
  %s4 = inlined_call_operand.vmem [shape: f32[1,256], index: 4, kind: input, shape index: {}]
  %s5 = inlined_call_operand.hbm [shape: bf16[256,128], index: 5, kind: input, shape index: {}]
  %s6 = inlined_call_operand.vmem [shape: f32[1,128], index: 6, kind: input, shape index: {}]
  %s7 = inlined_call_operand.vmem [shape: f32[8,128], index: 7, kind: output, shape index: {}]
  %s8 = sld [smem:[#allocation0]]
  $region50: #{base_discriminator_forward.1} parent=0
    _
  %s10 = ssub.s32 1, %s8
  %s11 = scalar_select 0, %s10, %s8
  $region1: #{base_discriminator_forward.1} parent=0
    #allocation2 [shape = 'u8[262144]{0}', space=vmem, size = 0x40000, scoped, tag = 'input window, operand 1, single buffered']
    #allocation3 [shape = 's32[1]{0}', space=sflag, size = 0x4, scoped, tag = 'scoped memory for base_discriminator_forward.1']
    #allocation4 [shape = 'u8[262144]{0}', space=vmem, size = 0x40000, scoped, tag = 'input window, operand 3, single buffered']
    #allocation5 [shape = 's32[1]{0}', space=sflag, size = 0x4, scoped, tag = 'scoped memory for base_discriminator_forward.1']
    #allocation6 [shape = 'u8[65536]{0}', space=vmem, size = 0x10000, scoped, tag = 'input window, operand 5, single buffered']
    %12 = vsyncpa [#allocation3], 0
    %13 = vsyncpa [#allocation5], 0
    // Predicated region
    $region2: #{base_discriminator_forward.1} parent=1 // pred_check
      _
    $region3: #{base_discriminator_forward.1} parent=1 // pred_check_branch
      %15 = sbr.rel (0) target = $region5
    $region4: #{base_discriminator_forward.1} parent=1 // pred_region
      _
    $region5: #{base_discriminator_forward.1} parent=1 // pred_fallthru
      _
    // Predicated region
    $region6: #{base_discriminator_forward.1} parent=1 // pred_check
      _
    $region7: #{base_discriminator_forward.1} parent=1 // pred_check_branch
      %17 = sbr.rel (0) target = $region9
    $region8: #{base_discriminator_forward.1} parent=1 // pred_region
      %s19 = ssub.s32 8192, 8192
      %20 = vsyncadd [#allocation3], %s19
      %s21 = sshll.u32 [#allocation2], 4
      %s22 = int_to_ptr.vmem [resolvable:$true] %s21
      %27 = dma.hbm_to_vmem [thread:$0]  %s1, 8192, %s22, [#allocation3], 256, 256, 16
    $region9: #{base_discriminator_forward.1} parent=1 // pred_fallthru
      _
    // Predicated region
    $region10: #{base_discriminator_forward.1} parent=1 // pred_check
      _
    $region11: #{base_discriminator_forward.1} parent=1 // pred_check_branch
      %29 = sbr.rel (0) target = $region13
    $region12: #{base_discriminator_forward.1} parent=1 // pred_region
      _
    $region13: #{base_discriminator_forward.1} parent=1 // pred_fallthru
      _
    // Predicated region
    $region14: #{base_discriminator_forward.1} parent=1 // pred_check
      _
    $region15: #{base_discriminator_forward.1} parent=1 // pred_check_branch
      %31 = sbr.rel (0) target = $region17
    $region16: #{base_discriminator_forward.1} parent=1 // pred_region
      %s33 = ssub.s32 8192, 8192
      %34 = vsyncadd [#allocation5], %s33
      %s35 = sshll.u32 [#allocation4], 4
      %s36 = int_to_ptr.vmem [resolvable:$true] %s35
      %41 = dma.hbm_to_vmem [thread:$0]  %s3, 8192, %s36, [#allocation5], 128, 128, 8
    $region17: #{base_discriminator_forward.1} parent=1 // pred_fallthru
      _
    // Predicated region
    $region18: #{base_discriminator_forward.1} parent=1 // pred_check
      _
    $region19: #{base_discriminator_forward.1} parent=1 // pred_check_branch
      %43 = sbr.rel (0) target = $region21
    $region20: #{base_discriminator_forward.1} parent=1 // pred_region
      _
    $region21: #{base_discriminator_forward.1} parent=1 // pred_fallthru
      _
    // Predicated region
    $region22: #{base_discriminator_forward.1} parent=1 // pred_check
      _
    $region23: #{base_discriminator_forward.1} parent=1 // pred_check_branch
      %45 = sbr.rel (0) target = $region25
    $region24: #{base_discriminator_forward.1} parent=1 // pred_region
      %s47 = ssub.s32 2048, 2048
      %48 = vsyncadd [#allocation5], %s47
      %s49 = sshll.u32 [#allocation6], 4
      %s50 = int_to_ptr.vmem [resolvable:$true] %s49
      %55 = dma.hbm_to_vmem [thread:$0]  %s5, 2048, %s50, [#allocation5], 64, 64, 4
    $region25: #{base_discriminator_forward.1} parent=1 // pred_fallthru
      _
    // Predicated region
    $region26: #{base_discriminator_forward.1} parent=1 // pred_check
      _
    $region27: #{base_discriminator_forward.1} parent=1 // pred_check_branch
      %57 = sbr.rel (0) target = $region29
    $region28: #{base_discriminator_forward.1} parent=1 // pred_region
      _
    $region29: #{base_discriminator_forward.1} parent=1 // pred_fallthru
      _
    // Predicated region
    $region30: #{base_discriminator_forward.1} parent=1 // pred_check
      _
    $region31: #{base_discriminator_forward.1} parent=1 // pred_check_branch
      %59 = sbr.rel (0) target = $region33
    $region32: #{base_discriminator_forward.1} parent=1 // pred_region
      %60 = dma.done [#allocation3], 8192
    $region33: #{base_discriminator_forward.1} parent=1 // pred_fallthru
      _
    // Predicated region
    $region34: #{base_discriminator_forward.1} parent=1 // pred_check
      _
    $region35: #{base_discriminator_forward.1} parent=1 // pred_check_branch
      %62 = sbr.rel (0) target = $region37
    $region36: #{base_discriminator_forward.1} parent=1 // pred_region
      %63 = dma.done [#allocation5], 8192
    $region37: #{base_discriminator_forward.1} parent=1 // pred_fallthru
      _
    // Predicated region
    $region38: #{base_discriminator_forward.1} parent=1 // pred_check
      _
    $region39: #{base_discriminator_forward.1} parent=1 // pred_check_branch
      %65 = sbr.rel (0) target = $region41
    $region40: #{base_discriminator_forward.1} parent=1 // pred_region
      %66 = dma.done [#allocation5], 2048
    $region41: #{base_discriminator_forward.1} parent=1 // pred_fallthru
      _
    %v68 = vld [vmem:[%s0] sm:$0xff]
    %v69 = vld [vmem:[%s0 + $0x8] sm:$0xff]
    %v70 = vpack.c.bf16 %v68, %v68
    %v71 = vpack.c.bf16 %v69, %v69
    %v72 = vld [vmem:[#allocation2] sm:$0xff]
    %v73 = vld [vmem:[#allocation2 + $0x8] sm:$0xff]
    %v74 = vld [vmem:[#allocation2 + $0x10] sm:$0xff]
    %v75 = vld [vmem:[#allocation2 + $0x18] sm:$0xff]
    %v76 = vld [vmem:[#allocation2 + $0x20] sm:$0xff]
    %v77 = vld [vmem:[#allocation2 + $0x28] sm:$0xff]
    %v78 = vld [vmem:[#allocation2 + $0x30] sm:$0xff]
    %v79 = vld [vmem:[#allocation2 + $0x38] sm:$0xff]
    %v80 = vld [vmem:[#allocation2 + $0x40] sm:$0xff]
    %v81 = vld [vmem:[#allocation2 + $0x48] sm:$0xff]
    %v82 = vld [vmem:[#allocation2 + $0x50] sm:$0xff]
    %v83 = vld [vmem:[#allocation2 + $0x58] sm:$0xff]
    %v84 = vld [vmem:[#allocation2 + $0x60] sm:$0xff]
    %v85 = vld [vmem:[#allocation2 + $0x68] sm:$0xff]
    %v86 = vld [vmem:[#allocation2 + $0x70] sm:$0xff]
    %v87 = vld [vmem:[#allocation2 + $0x78] sm:$0xff]
    %v88 = vld [vmem:[#allocation2 + $0x80] sm:$0xff]
    %v89 = vld [vmem:[#allocation2 + $0x88] sm:$0xff]
    %v90 = vld [vmem:[#allocation2 + $0x90] sm:$0xff]
    %v91 = vld [vmem:[#allocation2 + $0x98] sm:$0xff]
    %v92 = vld [vmem:[#allocation2 + $0xa0] sm:$0xff]
    %v93 = vld [vmem:[#allocation2 + $0xa8] sm:$0xff]
    %v94 = vld [vmem:[#allocation2 + $0xb0] sm:$0xff]
    %v95 = vld [vmem:[#allocation2 + $0xb8] sm:$0xff]
    %v96 = vld [vmem:[#allocation2 + $0xc0] sm:$0xff]
    %v97 = vld [vmem:[#allocation2 + $0xc8] sm:$0xff]
    %v98 = vld [vmem:[#allocation2 + $0xd0] sm:$0xff]
    %v99 = vld [vmem:[#allocation2 + $0xd8] sm:$0xff]
    %v100 = vld [vmem:[#allocation2 + $0xe0] sm:$0xff]
    %v101 = vld [vmem:[#allocation2 + $0xe8] sm:$0xff]
    %v102 = vld [vmem:[#allocation2 + $0xf0] sm:$0xff]
    %v103 = vld [vmem:[#allocation2 + $0xf8] sm:$0xff]
    %v104 = vld [vmem:[#allocation2 + $0x100] sm:$0xff]
    %v105 = vld [vmem:[#allocation2 + $0x108] sm:$0xff]
    %v106 = vld [vmem:[#allocation2 + $0x110] sm:$0xff]
    %v107 = vld [vmem:[#allocation2 + $0x118] sm:$0xff]
    %v108 = vld [vmem:[#allocation2 + $0x120] sm:$0xff]
    %v109 = vld [vmem:[#allocation2 + $0x128] sm:$0xff]
    %v110 = vld [vmem:[#allocation2 + $0x130] sm:$0xff]
    %v111 = vld [vmem:[#allocation2 + $0x138] sm:$0xff]
    %v112 = vld [vmem:[#allocation2 + $0x140] sm:$0xff]
    %v113 = vld [vmem:[#allocation2 + $0x148] sm:$0xff]
    %v114 = vld [vmem:[#allocation2 + $0x150] sm:$0xff]
    %v115 = vld [vmem:[#allocation2 + $0x158] sm:$0xff]
    %v116 = vld [vmem:[#allocation2 + $0x160] sm:$0xff]
    %v117 = vld [vmem:[#allocation2 + $0x168] sm:$0xff]
    %v118 = vld [vmem:[#allocation2 + $0x170] sm:$0xff]
    %v119 = vld [vmem:[#allocation2 + $0x178] sm:$0xff]
    %v120 = vld [vmem:[#allocation2 + $0x180] sm:$0xff]
    %v121 = vld [vmem:[#allocation2 + $0x188] sm:$0xff]
    %v122 = vld [vmem:[#allocation2 + $0x190] sm:$0xff]
    %v123 = vld [vmem:[#allocation2 + $0x198] sm:$0xff]
    %v124 = vld [vmem:[#allocation2 + $0x1a0] sm:$0xff]
    %v125 = vld [vmem:[#allocation2 + $0x1a8] sm:$0xff]
    %v126 = vld [vmem:[#allocation2 + $0x1b0] sm:$0xff]
    %v127 = vld [vmem:[#allocation2 + $0x1b8] sm:$0xff]
    %v128 = vld [vmem:[#allocation2 + $0x1c0] sm:$0xff]
    %v129 = vld [vmem:[#allocation2 + $0x1c8] sm:$0xff]
    %v130 = vld [vmem:[#allocation2 + $0x1d0] sm:$0xff]
    %v131 = vld [vmem:[#allocation2 + $0x1d8] sm:$0xff]
    %v132 = vld [vmem:[#allocation2 + $0x1e0] sm:$0xff]
    %v133 = vld [vmem:[#allocation2 + $0x1e8] sm:$0xff]
    %v134 = vld [vmem:[#allocation2 + $0x1f0] sm:$0xff]
    %v135 = vld [vmem:[#allocation2 + $0x1f8] sm:$0xff]
    %v136 = vld [vmem:[%s2] sm:$0xf]
    %v138 = vlaneseq
    %v139 = vshrl.u32 %v138, 7
    %v140 = vsub.s32 0, %v139
    %v141 = vrot.slane %v136, %v140
    %v142 = vlaneseq
    %v143 = vshrl.u32 %v142, 7
    %v144 = vsub.s32 1, %v143
    %v145 = vrot.slane %v136, %v144
    %v146 = vlaneseq
    %v147 = vshrl.u32 %v146, 7
    %v148 = vsub.s32 2, %v147
    %v149 = vrot.slane %v136, %v148
    %v150 = vlaneseq
    %v151 = vshrl.u32 %v150, 7
    %v152 = vsub.s32 3, %v151
    %v153 = vrot.slane %v136, %v152
    %v222 = vunpack.c.l.b16 %v72
    %v223 = vunpack.c.h.b16 %v72
    %v224 = vunpack.c.l.b16 %v73
    %v225 = vunpack.c.h.b16 %v73
    %v226 = vunpack.c.l.b16 %v74
    %v227 = vunpack.c.h.b16 %v74
    %v228 = vunpack.c.l.b16 %v75
    %v229 = vunpack.c.h.b16 %v75
    %v230 = vunpack.c.l.b16 %v76
    %v231 = vunpack.c.h.b16 %v76
    %v232 = vunpack.c.l.b16 %v77
    %v233 = vunpack.c.h.b16 %v77
    %v234 = vunpack.c.l.b16 %v78
    %v235 = vunpack.c.h.b16 %v78
    %v236 = vunpack.c.l.b16 %v79
    %v237 = vunpack.c.h.b16 %v79
    %v238 = vunpack.c.l.b16 %v80
    %v239 = vunpack.c.h.b16 %v80
    %v240 = vunpack.c.l.b16 %v81
    %v241 = vunpack.c.h.b16 %v81
    %v242 = vunpack.c.l.b16 %v82
    %v243 = vunpack.c.h.b16 %v82
    %v244 = vunpack.c.l.b16 %v83
    %v245 = vunpack.c.h.b16 %v83
    %v246 = vunpack.c.l.b16 %v84
    %v247 = vunpack.c.h.b16 %v84
    %v248 = vunpack.c.l.b16 %v85
    %v249 = vunpack.c.h.b16 %v85
    %v250 = vunpack.c.l.b16 %v86
    %v251 = vunpack.c.h.b16 %v86
    %v252 = vunpack.c.l.b16 %v87
    %v253 = vunpack.c.h.b16 %v87
    %v254 = vunpack.c.l.b16 %v88
    %v255 = vunpack.c.h.b16 %v88
    %v256 = vunpack.c.l.b16 %v89
    %v257 = vunpack.c.h.b16 %v89
    %v258 = vunpack.c.l.b16 %v90
    %v259 = vunpack.c.h.b16 %v90
    %v260 = vunpack.c.l.b16 %v91
    %v261 = vunpack.c.h.b16 %v91
    %v262 = vunpack.c.l.b16 %v92
    %v263 = vunpack.c.h.b16 %v92
    %v264 = vunpack.c.l.b16 %v93
    %v265 = vunpack.c.h.b16 %v93
    %v266 = vunpack.c.l.b16 %v94
    %v267 = vunpack.c.h.b16 %v94
    %v268 = vunpack.c.l.b16 %v95
    %v269 = vunpack.c.h.b16 %v95
    %v270 = vunpack.c.l.b16 %v96
    %v271 = vunpack.c.h.b16 %v96
    %v272 = vunpack.c.l.b16 %v97
    %v273 = vunpack.c.h.b16 %v97
    %v274 = vunpack.c.l.b16 %v98
    %v275 = vunpack.c.h.b16 %v98
    %v276 = vunpack.c.l.b16 %v99
    %v277 = vunpack.c.h.b16 %v99
    %v278 = vunpack.c.l.b16 %v100
    %v279 = vunpack.c.h.b16 %v100
    %v280 = vunpack.c.l.b16 %v101
    %v281 = vunpack.c.h.b16 %v101
    %v282 = vunpack.c.l.b16 %v102
    %v283 = vunpack.c.h.b16 %v102
    %v284 = vunpack.c.l.b16 %v103
    %v285 = vunpack.c.h.b16 %v103
    %v286 = vunpack.c.l.b16 %v104
    %v287 = vunpack.c.h.b16 %v104
    %v288 = vunpack.c.l.b16 %v105
    %v289 = vunpack.c.h.b16 %v105
    %v290 = vunpack.c.l.b16 %v106
    %v291 = vunpack.c.h.b16 %v106
    %v292 = vunpack.c.l.b16 %v107
    %v293 = vunpack.c.h.b16 %v107
    %v294 = vunpack.c.l.b16 %v108
    %v295 = vunpack.c.h.b16 %v108
    %v296 = vunpack.c.l.b16 %v109
    %v297 = vunpack.c.h.b16 %v109
    %v298 = vunpack.c.l.b16 %v110
    %v299 = vunpack.c.h.b16 %v110
    %v300 = vunpack.c.l.b16 %v111
    %v301 = vunpack.c.h.b16 %v111
    %v302 = vunpack.c.l.b16 %v112
    %v303 = vunpack.c.h.b16 %v112
    %v304 = vunpack.c.l.b16 %v113
    %v305 = vunpack.c.h.b16 %v113
    %v306 = vunpack.c.l.b16 %v114
    %v307 = vunpack.c.h.b16 %v114
    %v308 = vunpack.c.l.b16 %v115
    %v309 = vunpack.c.h.b16 %v115
    %v310 = vunpack.c.l.b16 %v116
    %v311 = vunpack.c.h.b16 %v116
    %v312 = vunpack.c.l.b16 %v117
    %v313 = vunpack.c.h.b16 %v117
    %v314 = vunpack.c.l.b16 %v118
    %v315 = vunpack.c.h.b16 %v118
    %v316 = vunpack.c.l.b16 %v119
    %v317 = vunpack.c.h.b16 %v119
    %v318 = vunpack.c.l.b16 %v120
    %v319 = vunpack.c.h.b16 %v120
    %v320 = vunpack.c.l.b16 %v121
    %v321 = vunpack.c.h.b16 %v121
    %v322 = vunpack.c.l.b16 %v122
    %v323 = vunpack.c.h.b16 %v122
    %v324 = vunpack.c.l.b16 %v123
    %v325 = vunpack.c.h.b16 %v123
    %v326 = vunpack.c.l.b16 %v124
    %v327 = vunpack.c.h.b16 %v124
    %v328 = vunpack.c.l.b16 %v125
    %v329 = vunpack.c.h.b16 %v125
    %v330 = vunpack.c.l.b16 %v126
    %v331 = vunpack.c.h.b16 %v126
    %v332 = vunpack.c.l.b16 %v127
    %v333 = vunpack.c.h.b16 %v127
    %v334 = vunpack.c.l.b16 %v128
    %v335 = vunpack.c.h.b16 %v128
    %v336 = vunpack.c.l.b16 %v129
    %v337 = vunpack.c.h.b16 %v129
    %v338 = vunpack.c.l.b16 %v130
    %v339 = vunpack.c.h.b16 %v130
    %v340 = vunpack.c.l.b16 %v131
    %v341 = vunpack.c.h.b16 %v131
    %v342 = vunpack.c.l.b16 %v132
    %v343 = vunpack.c.h.b16 %v132
    %v344 = vunpack.c.l.b16 %v133
    %v345 = vunpack.c.h.b16 %v133
    %v346 = vunpack.c.l.b16 %v134
    %v347 = vunpack.c.h.b16 %v134
    %v348 = vunpack.c.l.b16 %v135
    %v349 = vunpack.c.h.b16 %v135
    %v350 = vpack.c.b16 %v226, %v222
    %v351 = vpack.c.b16 %v227, %v223
    %v352 = vpack.c.b16 %v228, %v224
    %v353 = vpack.c.b16 %v229, %v225
    %v354 = vpack.c.b16 %v234, %v230
    %v355 = vpack.c.b16 %v235, %v231
    %v356 = vpack.c.b16 %v236, %v232
    %v357 = vpack.c.b16 %v237, %v233
    %v358 = vpack.c.b16 %v242, %v238
    %v359 = vpack.c.b16 %v243, %v239
    %v360 = vpack.c.b16 %v244, %v240
    %v361 = vpack.c.b16 %v245, %v241
    %v362 = vpack.c.b16 %v250, %v246
    %v363 = vpack.c.b16 %v251, %v247
    %v364 = vpack.c.b16 %v252, %v248
    %v365 = vpack.c.b16 %v253, %v249
    %v366 = vpack.c.b16 %v258, %v254
    %v367 = vpack.c.b16 %v259, %v255
    %v368 = vpack.c.b16 %v260, %v256
    %v369 = vpack.c.b16 %v261, %v257
    %v370 = vpack.c.b16 %v266, %v262
    %v371 = vpack.c.b16 %v267, %v263
    %v372 = vpack.c.b16 %v268, %v264
    %v373 = vpack.c.b16 %v269, %v265
    %v374 = vpack.c.b16 %v274, %v270
    %v375 = vpack.c.b16 %v275, %v271
    %v376 = vpack.c.b16 %v276, %v272
    %v377 = vpack.c.b16 %v277, %v273
    %v378 = vpack.c.b16 %v282, %v278
    %v379 = vpack.c.b16 %v283, %v279
    %v380 = vpack.c.b16 %v284, %v280
    %v381 = vpack.c.b16 %v285, %v281
    %v382 = vpack.c.b16 %v290, %v286
    %v383 = vpack.c.b16 %v291, %v287
    %v384 = vpack.c.b16 %v292, %v288
    %v385 = vpack.c.b16 %v293, %v289
    %v386 = vpack.c.b16 %v298, %v294
    %v387 = vpack.c.b16 %v299, %v295
    %v388 = vpack.c.b16 %v300, %v296
    %v389 = vpack.c.b16 %v301, %v297
    %v390 = vpack.c.b16 %v306, %v302
    %v391 = vpack.c.b16 %v307, %v303
    %v392 = vpack.c.b16 %v308, %v304
    %v393 = vpack.c.b16 %v309, %v305
    %v394 = vpack.c.b16 %v314, %v310
    %v395 = vpack.c.b16 %v315, %v311
    %v396 = vpack.c.b16 %v316, %v312
    %v397 = vpack.c.b16 %v317, %v313
    %v398 = vpack.c.b16 %v322, %v318
    %v399 = vpack.c.b16 %v323, %v319
    %v400 = vpack.c.b16 %v324, %v320
    %v401 = vpack.c.b16 %v325, %v321
    %v402 = vpack.c.b16 %v330, %v326
    %v403 = vpack.c.b16 %v331, %v327
    %v404 = vpack.c.b16 %v332, %v328
    %v405 = vpack.c.b16 %v333, %v329
    %v406 = vpack.c.b16 %v338, %v334
    %v407 = vpack.c.b16 %v339, %v335
    %v408 = vpack.c.b16 %v340, %v336
    %v409 = vpack.c.b16 %v341, %v337
    %v410 = vpack.c.b16 %v346, %v342
    %v411 = vpack.c.b16 %v347, %v343
    %v412 = vpack.c.b16 %v348, %v344
    %v413 = vpack.c.b16 %v349, %v345
    %478 = vmatprep.subr.bf16.mxu0 %v379
    %479 = vmatpush1.bf16.msra.mxu0 %v378
    %480 = vmatprep.subr.bf16.mxu0 %v375
    %481 = vmatpush1.bf16.msra.mxu0 %v374
    %482 = vmatprep.subr.bf16.mxu0 %v371
    %483 = vmatpush1.bf16.msra.mxu0 %v370
    %484 = vmatprep.subr.bf16.mxu0 %v367
    %485 = vmatpush1.bf16.msra.mxu0 %v366
    %486 = vmatprep.subr.bf16.mxu0 %v363
    %487 = vmatpush1.bf16.msra.mxu0 %v362
    %488 = vmatprep.subr.bf16.mxu0 %v359
    %489 = vmatpush1.bf16.msra.mxu0 %v358
    %490 = vmatprep.subr.bf16.mxu0 %v355
    %491 = vmatpush1.bf16.msra.mxu0 %v354
    %492 = vmatprep.subr.bf16.mxu0 %v351
    %493 = vmatpush1.bf16.msra.mxu0 %v350
    %494 = vmatprep.subr.bf16.mxu0 %v411
    %495 = vmatpush2.bf16.msra.mxu0 %v410
    %496 = vmatprep.subr.bf16.mxu0 %v407
    %497 = vmatpush2.bf16.msra.mxu0 %v406
    %498 = vmatprep.subr.bf16.mxu0 %v403
    %499 = vmatpush2.bf16.msra.mxu0 %v402
    %500 = vmatprep.subr.bf16.mxu0 %v399
    %501 = vmatpush2.bf16.msra.mxu0 %v398
    %502 = vmatprep.subr.bf16.mxu0 %v395
    %503 = vmatpush2.bf16.msra.mxu0 %v394
    %504 = vmatprep.subr.bf16.mxu0 %v391
    %505 = vmatpush2.bf16.msra.mxu0 %v390
    %506 = vmatprep.subr.bf16.mxu0 %v387
    %507 = vmatpush2.bf16.msra.mxu0 %v386
    %508 = vmatprep.subr.bf16.mxu0 %v383
    %509 = vmatpush2.bf16.msra.mxu0 %v382
    %510 = vmatprep.mubr.bf16.mxu0 %v71
    %511 = vmatmul.mubr.bf16.gmra.mxu0 %v70
    %v512 = vpop.f32.mrf.mxu0
    %v513 = vadd.f32 %v141, %v512
    %v514 = vpop.f32.mrf.mxu0
    %v515 = vadd.f32 %v145, %v514
    %v516 = vpop.f32.mrf.mxu0
    %v517 = vpop.f32.mrf.mxu0
    %518 = vdwg.mxu0
    %519 = vmatprep.subr.bf16.mxu0 %v381
    %520 = vmatpush1.bf16.msra.mxu0 %v380
    %521 = vmatprep.subr.bf16.mxu0 %v377
    %522 = vmatpush1.bf16.msra.mxu0 %v376
    %523 = vmatprep.subr.bf16.mxu0 %v373
    %524 = vmatpush1.bf16.msra.mxu0 %v372
    %525 = vmatprep.subr.bf16.mxu0 %v369
    %526 = vmatpush1.bf16.msra.mxu0 %v368
    %527 = vmatprep.subr.bf16.mxu0 %v365
    %528 = vmatpush1.bf16.msra.mxu0 %v364
    %529 = vmatprep.subr.bf16.mxu0 %v361
    %530 = vmatpush1.bf16.msra.mxu0 %v360
    %531 = vmatprep.subr.bf16.mxu0 %v357
    %532 = vmatpush1.bf16.msra.mxu0 %v356
    %533 = vmatprep.subr.bf16.mxu0 %v353
    %534 = vmatpush1.bf16.msra.mxu0 %v352
    %535 = vmatprep.subr.bf16.mxu0 %v413
    %536 = vmatpush2.bf16.msra.mxu0 %v412
    %537 = vmatprep.subr.bf16.mxu0 %v409
    %538 = vmatpush2.bf16.msra.mxu0 %v408
    %539 = vmatprep.subr.bf16.mxu0 %v405
    %540 = vmatpush2.bf16.msra.mxu0 %v404
    %541 = vmatprep.subr.bf16.mxu0 %v401
    %542 = vmatpush2.bf16.msra.mxu0 %v400
    %543 = vmatprep.subr.bf16.mxu0 %v397
    %544 = vmatpush2.bf16.msra.mxu0 %v396
    %545 = vmatprep.subr.bf16.mxu0 %v393
    %546 = vmatpush2.bf16.msra.mxu0 %v392
    %547 = vmatprep.subr.bf16.mxu0 %v389
    %548 = vmatpush2.bf16.msra.mxu0 %v388
    %549 = vmatprep.subr.bf16.mxu0 %v385
    %550 = vmatpush2.bf16.msra.mxu0 %v384
    %551 = vmatprep.mubr.bf16.mxu0 %v71
    %552 = vmatmul.mubr.bf16.gmra.mxu0 %v70
    %v553 = vpop.f32.mrf.mxu0
    %v554 = vadd.f32 %v149, %v553
    %v555 = vpop.f32.mrf.mxu0
    %v556 = vadd.f32 %v153, %v555
    %v557 = vpop.f32.mrf.mxu0
    %v558 = vpop.f32.mrf.mxu0
    %559 = vdwg.mxu0
    %vm560 = vcmp.gt.f32.partialorder %v513, 0.0
    %vm561 = vcmp.gt.f32.partialorder %v515, 0.0
    %vm562 = vcmp.gt.f32.partialorder %v554, 0.0
    %vm563 = vcmp.gt.f32.partialorder %v556, 0.0
    %v564 = vmul.f32 %v513, 0.2
    %v565 = vmul.f32 %v515, 0.2
    %v566 = vmul.f32 %v554, 0.2
    %v567 = vmul.f32 %v556, 0.2
    %v568 = vsel %vm560, %v513, %v564
    %v569 = vsel %vm561, %v515, %v565
    %v570 = vsel %vm562, %v554, %v566
    %v571 = vsel %vm563, %v556, %v567
    %v572 = vpack.c.bf16 %v568, %v568
    %v573 = vpack.c.bf16 %v569, %v569
    %v574 = vpack.c.bf16 %v570, %v570
    %v575 = vpack.c.bf16 %v571, %v571
    %v576 = vld [vmem:[#allocation4] sm:$0xff]
    %v577 = vld [vmem:[#allocation4 + $0x8] sm:$0xff]
    %v578 = vld [vmem:[#allocation4 + $0x10] sm:$0xff]
    %v579 = vld [vmem:[#allocation4 + $0x18] sm:$0xff]
    %v580 = vld [vmem:[#allocation4 + $0x20] sm:$0xff]
    %v581 = vld [vmem:[#allocation4 + $0x28] sm:$0xff]
    %v582 = vld [vmem:[#allocation4 + $0x30] sm:$0xff]
    %v583 = vld [vmem:[#allocation4 + $0x38] sm:$0xff]
    %v584 = vld [vmem:[#allocation4 + $0x40] sm:$0xff]
    %v585 = vld [vmem:[#allocation4 + $0x48] sm:$0xff]
    %v586 = vld [vmem:[#allocation4 + $0x50] sm:$0xff]
    %v587 = vld [vmem:[#allocation4 + $0x58] sm:$0xff]
    %v588 = vld [vmem:[#allocation4 + $0x60] sm:$0xff]
    %v589 = vld [vmem:[#allocation4 + $0x68] sm:$0xff]
    %v590 = vld [vmem:[#allocation4 + $0x70] sm:$0xff]
    %v591 = vld [vmem:[#allocation4 + $0x78] sm:$0xff]
    %v592 = vld [vmem:[#allocation4 + $0x80] sm:$0xff]
    %v593 = vld [vmem:[#allocation4 + $0x88] sm:$0xff]
    %v594 = vld [vmem:[#allocation4 + $0x90] sm:$0xff]
    %v595 = vld [vmem:[#allocation4 + $0x98] sm:$0xff]
    %v596 = vld [vmem:[#allocation4 + $0xa0] sm:$0xff]
    %v597 = vld [vmem:[#allocation4 + $0xa8] sm:$0xff]
    %v598 = vld [vmem:[#allocation4 + $0xb0] sm:$0xff]
    %v599 = vld [vmem:[#allocation4 + $0xb8] sm:$0xff]
    %v600 = vld [vmem:[#allocation4 + $0xc0] sm:$0xff]
    %v601 = vld [vmem:[#allocation4 + $0xc8] sm:$0xff]
    %v602 = vld [vmem:[#allocation4 + $0xd0] sm:$0xff]
    %v603 = vld [vmem:[#allocation4 + $0xd8] sm:$0xff]
    %v604 = vld [vmem:[#allocation4 + $0xe0] sm:$0xff]
    %v605 = vld [vmem:[#allocation4 + $0xe8] sm:$0xff]
    %v606 = vld [vmem:[#allocation4 + $0xf0] sm:$0xff]
    %v607 = vld [vmem:[#allocation4 + $0xf8] sm:$0xff]
    %v608 = vld [vmem:[#allocation4 + $0x100] sm:$0xff]
    %v609 = vld [vmem:[#allocation4 + $0x108] sm:$0xff]
    %v610 = vld [vmem:[#allocation4 + $0x110] sm:$0xff]
    %v611 = vld [vmem:[#allocation4 + $0x118] sm:$0xff]
    %v612 = vld [vmem:[#allocation4 + $0x120] sm:$0xff]
    %v613 = vld [vmem:[#allocation4 + $0x128] sm:$0xff]
    %v614 = vld [vmem:[#allocation4 + $0x130] sm:$0xff]
    %v615 = vld [vmem:[#allocation4 + $0x138] sm:$0xff]
    %v616 = vld [vmem:[#allocation4 + $0x140] sm:$0xff]
    %v617 = vld [vmem:[#allocation4 + $0x148] sm:$0xff]
    %v618 = vld [vmem:[#allocation4 + $0x150] sm:$0xff]
    %v619 = vld [vmem:[#allocation4 + $0x158] sm:$0xff]
    %v620 = vld [vmem:[#allocation4 + $0x160] sm:$0xff]
    %v621 = vld [vmem:[#allocation4 + $0x168] sm:$0xff]
    %v622 = vld [vmem:[#allocation4 + $0x170] sm:$0xff]
    %v623 = vld [vmem:[#allocation4 + $0x178] sm:$0xff]
    %v624 = vld [vmem:[#allocation4 + $0x180] sm:$0xff]
    %v625 = vld [vmem:[#allocation4 + $0x188] sm:$0xff]
    %v626 = vld [vmem:[#allocation4 + $0x190] sm:$0xff]
    %v627 = vld [vmem:[#allocation4 + $0x198] sm:$0xff]
    %v628 = vld [vmem:[#allocation4 + $0x1a0] sm:$0xff]
    %v629 = vld [vmem:[#allocation4 + $0x1a8] sm:$0xff]
    %v630 = vld [vmem:[#allocation4 + $0x1b0] sm:$0xff]
    %v631 = vld [vmem:[#allocation4 + $0x1b8] sm:$0xff]
    %v632 = vld [vmem:[#allocation4 + $0x1c0] sm:$0xff]
    %v633 = vld [vmem:[#allocation4 + $0x1c8] sm:$0xff]
    %v634 = vld [vmem:[#allocation4 + $0x1d0] sm:$0xff]
    %v635 = vld [vmem:[#allocation4 + $0x1d8] sm:$0xff]
    %v636 = vld [vmem:[#allocation4 + $0x1e0] sm:$0xff]
    %v637 = vld [vmem:[#allocation4 + $0x1e8] sm:$0xff]
    %v638 = vld [vmem:[#allocation4 + $0x1f0] sm:$0xff]
    %v639 = vld [vmem:[#allocation4 + $0x1f8] sm:$0xff]
    %v640 = vld [vmem:[%s4] sm:$0x3]
    %v642 = vlaneseq
    %v643 = vshrl.u32 %v642, 7
    %v644 = vsub.s32 0, %v643
    %v645 = vrot.slane %v640, %v644
    %v646 = vlaneseq
    %v647 = vshrl.u32 %v646, 7
    %v648 = vsub.s32 1, %v647
    %v649 = vrot.slane %v640, %v648
    %v716 = vunpack.c.l.b16 %v576
    %v717 = vunpack.c.h.b16 %v576
    %v718 = vunpack.c.l.b16 %v577
    %v719 = vunpack.c.h.b16 %v577
    %v720 = vunpack.c.l.b16 %v578
    %v721 = vunpack.c.h.b16 %v578
    %v722 = vunpack.c.l.b16 %v579
    %v723 = vunpack.c.h.b16 %v579
    %v724 = vunpack.c.l.b16 %v580
    %v725 = vunpack.c.h.b16 %v580
    %v726 = vunpack.c.l.b16 %v581
    %v727 = vunpack.c.h.b16 %v581
    %v728 = vunpack.c.l.b16 %v582
    %v729 = vunpack.c.h.b16 %v582
    %v730 = vunpack.c.l.b16 %v583
    %v731 = vunpack.c.h.b16 %v583
    %v732 = vunpack.c.l.b16 %v584
    %v733 = vunpack.c.h.b16 %v584
    %v734 = vunpack.c.l.b16 %v585
    %v735 = vunpack.c.h.b16 %v585
    %v736 = vunpack.c.l.b16 %v586
    %v737 = vunpack.c.h.b16 %v586
    %v738 = vunpack.c.l.b16 %v587
    %v739 = vunpack.c.h.b16 %v587
    %v740 = vunpack.c.l.b16 %v588
    %v741 = vunpack.c.h.b16 %v588
    %v742 = vunpack.c.l.b16 %v589
    %v743 = vunpack.c.h.b16 %v589
    %v744 = vunpack.c.l.b16 %v590
    %v745 = vunpack.c.h.b16 %v590
    %v746 = vunpack.c.l.b16 %v591
    %v747 = vunpack.c.h.b16 %v591
    %v748 = vunpack.c.l.b16 %v592
    %v749 = vunpack.c.h.b16 %v592
    %v750 = vunpack.c.l.b16 %v593
    %v751 = vunpack.c.h.b16 %v593
    %v752 = vunpack.c.l.b16 %v594
    %v753 = vunpack.c.h.b16 %v594
    %v754 = vunpack.c.l.b16 %v595
    %v755 = vunpack.c.h.b16 %v595
    %v756 = vunpack.c.l.b16 %v596
    %v757 = vunpack.c.h.b16 %v596
    %v758 = vunpack.c.l.b16 %v597
    %v759 = vunpack.c.h.b16 %v597
    %v760 = vunpack.c.l.b16 %v598
    %v761 = vunpack.c.h.b16 %v598
    %v762 = vunpack.c.l.b16 %v599
    %v763 = vunpack.c.h.b16 %v599
    %v764 = vunpack.c.l.b16 %v600
    %v765 = vunpack.c.h.b16 %v600
    %v766 = vunpack.c.l.b16 %v601
    %v767 = vunpack.c.h.b16 %v601
    %v768 = vunpack.c.l.b16 %v602
    %v769 = vunpack.c.h.b16 %v602
    %v770 = vunpack.c.l.b16 %v603
    %v771 = vunpack.c.h.b16 %v603
    %v772 = vunpack.c.l.b16 %v604
    %v773 = vunpack.c.h.b16 %v604
    %v774 = vunpack.c.l.b16 %v605
    %v775 = vunpack.c.h.b16 %v605
    %v776 = vunpack.c.l.b16 %v606
    %v777 = vunpack.c.h.b16 %v606
    %v778 = vunpack.c.l.b16 %v607
    %v779 = vunpack.c.h.b16 %v607
    %v780 = vunpack.c.l.b16 %v608
    %v781 = vunpack.c.h.b16 %v608
    %v782 = vunpack.c.l.b16 %v609
    %v783 = vunpack.c.h.b16 %v609
    %v784 = vunpack.c.l.b16 %v610
    %v785 = vunpack.c.h.b16 %v610
    %v786 = vunpack.c.l.b16 %v611
    %v787 = vunpack.c.h.b16 %v611
    %v788 = vunpack.c.l.b16 %v612
    %v789 = vunpack.c.h.b16 %v612
    %v790 = vunpack.c.l.b16 %v613
    %v791 = vunpack.c.h.b16 %v613
    %v792 = vunpack.c.l.b16 %v614
    %v793 = vunpack.c.h.b16 %v614
    %v794 = vunpack.c.l.b16 %v615
    %v795 = vunpack.c.h.b16 %v615
    %v796 = vunpack.c.l.b16 %v616
    %v797 = vunpack.c.h.b16 %v616
    %v798 = vunpack.c.l.b16 %v617
    %v799 = vunpack.c.h.b16 %v617
    %v800 = vunpack.c.l.b16 %v618
    %v801 = vunpack.c.h.b16 %v618
    %v802 = vunpack.c.l.b16 %v619
    %v803 = vunpack.c.h.b16 %v619
    %v804 = vunpack.c.l.b16 %v620
    %v805 = vunpack.c.h.b16 %v620
    %v806 = vunpack.c.l.b16 %v621
    %v807 = vunpack.c.h.b16 %v621
    %v808 = vunpack.c.l.b16 %v622
    %v809 = vunpack.c.h.b16 %v622
    %v810 = vunpack.c.l.b16 %v623
    %v811 = vunpack.c.h.b16 %v623
    %v812 = vunpack.c.l.b16 %v624
    %v813 = vunpack.c.h.b16 %v624
    %v814 = vunpack.c.l.b16 %v625
    %v815 = vunpack.c.h.b16 %v625
    %v816 = vunpack.c.l.b16 %v626
    %v817 = vunpack.c.h.b16 %v626
    %v818 = vunpack.c.l.b16 %v627
    %v819 = vunpack.c.h.b16 %v627
    %v820 = vunpack.c.l.b16 %v628
    %v821 = vunpack.c.h.b16 %v628
    %v822 = vunpack.c.l.b16 %v629
    %v823 = vunpack.c.h.b16 %v629
    %v824 = vunpack.c.l.b16 %v630
    %v825 = vunpack.c.h.b16 %v630
    %v826 = vunpack.c.l.b16 %v631
    %v827 = vunpack.c.h.b16 %v631
    %v828 = vunpack.c.l.b16 %v632
    %v829 = vunpack.c.h.b16 %v632
    %v830 = vunpack.c.l.b16 %v633
    %v831 = vunpack.c.h.b16 %v633
    %v832 = vunpack.c.l.b16 %v634
    %v833 = vunpack.c.h.b16 %v634
    %v834 = vunpack.c.l.b16 %v635
    %v835 = vunpack.c.h.b16 %v635
    %v836 = vunpack.c.l.b16 %v636
    %v837 = vunpack.c.h.b16 %v636
    %v838 = vunpack.c.l.b16 %v637
    %v839 = vunpack.c.h.b16 %v637
    %v840 = vunpack.c.l.b16 %v638
    %v841 = vunpack.c.h.b16 %v638
    %v842 = vunpack.c.l.b16 %v639
    %v843 = vunpack.c.h.b16 %v639
    %v844 = vpack.c.b16 %v718, %v716
    %v845 = vpack.c.b16 %v719, %v717
    %v846 = vpack.c.b16 %v722, %v720
    %v847 = vpack.c.b16 %v723, %v721
    %v848 = vpack.c.b16 %v726, %v724
    %v849 = vpack.c.b16 %v727, %v725
    %v850 = vpack.c.b16 %v730, %v728
    %v851 = vpack.c.b16 %v731, %v729
    %v852 = vpack.c.b16 %v734, %v732
    %v853 = vpack.c.b16 %v735, %v733
    %v854 = vpack.c.b16 %v738, %v736
    %v855 = vpack.c.b16 %v739, %v737
    %v856 = vpack.c.b16 %v742, %v740
    %v857 = vpack.c.b16 %v743, %v741
    %v858 = vpack.c.b16 %v746, %v744
    %v859 = vpack.c.b16 %v747, %v745
    %v860 = vpack.c.b16 %v750, %v748
    %v861 = vpack.c.b16 %v751, %v749
    %v862 = vpack.c.b16 %v754, %v752
    %v863 = vpack.c.b16 %v755, %v753
    %v864 = vpack.c.b16 %v758, %v756
    %v865 = vpack.c.b16 %v759, %v757
    %v866 = vpack.c.b16 %v762, %v760
    %v867 = vpack.c.b16 %v763, %v761
    %v868 = vpack.c.b16 %v766, %v764
    %v869 = vpack.c.b16 %v767, %v765
    %v870 = vpack.c.b16 %v770, %v768
    %v871 = vpack.c.b16 %v771, %v769
    %v872 = vpack.c.b16 %v774, %v772
    %v873 = vpack.c.b16 %v775, %v773
    %v874 = vpack.c.b16 %v778, %v776
    %v875 = vpack.c.b16 %v779, %v777
    %v876 = vpack.c.b16 %v782, %v780
    %v877 = vpack.c.b16 %v783, %v781
    %v878 = vpack.c.b16 %v786, %v784
    %v879 = vpack.c.b16 %v787, %v785
    %v880 = vpack.c.b16 %v790, %v788
    %v881 = vpack.c.b16 %v791, %v789
    %v882 = vpack.c.b16 %v794, %v792
    %v883 = vpack.c.b16 %v795, %v793
    %v884 = vpack.c.b16 %v798, %v796
    %v885 = vpack.c.b16 %v799, %v797
    %v886 = vpack.c.b16 %v802, %v800
    %v887 = vpack.c.b16 %v803, %v801
    %v888 = vpack.c.b16 %v806, %v804
    %v889 = vpack.c.b16 %v807, %v805
    %v890 = vpack.c.b16 %v810, %v808
    %v891 = vpack.c.b16 %v811, %v809
    %v892 = vpack.c.b16 %v814, %v812
    %v893 = vpack.c.b16 %v815, %v813
    %v894 = vpack.c.b16 %v818, %v816
    %v895 = vpack.c.b16 %v819, %v817
    %v896 = vpack.c.b16 %v822, %v820
    %v897 = vpack.c.b16 %v823, %v821
    %v898 = vpack.c.b16 %v826, %v824
    %v899 = vpack.c.b16 %v827, %v825
    %v900 = vpack.c.b16 %v830, %v828
    %v901 = vpack.c.b16 %v831, %v829
    %v902 = vpack.c.b16 %v834, %v832
    %v903 = vpack.c.b16 %v835, %v833
    %v904 = vpack.c.b16 %v838, %v836
    %v905 = vpack.c.b16 %v839, %v837
    %v906 = vpack.c.b16 %v842, %v840
    %v907 = vpack.c.b16 %v843, %v841
    %972 = vmatprep.subr.bf16.mxu0 %v859
    %973 = vmatpush1.bf16.msra.mxu0 %v858
    %974 = vmatprep.subr.bf16.mxu0 %v857
    %975 = vmatpush1.bf16.msra.mxu0 %v856
    %976 = vmatprep.subr.bf16.mxu0 %v855
    %977 = vmatpush1.bf16.msra.mxu0 %v854
    %978 = vmatprep.subr.bf16.mxu0 %v853
    %979 = vmatpush1.bf16.msra.mxu0 %v852
    %980 = vmatprep.subr.bf16.mxu0 %v851
    %981 = vmatpush1.bf16.msra.mxu0 %v850
    %982 = vmatprep.subr.bf16.mxu0 %v849
    %983 = vmatpush1.bf16.msra.mxu0 %v848
    %984 = vmatprep.subr.bf16.mxu0 %v847
    %985 = vmatpush1.bf16.msra.mxu0 %v846
    %986 = vmatprep.subr.bf16.mxu0 %v845
    %987 = vmatpush1.bf16.msra.mxu0 %v844
    %988 = vmatprep.subr.bf16.mxu0 %v875
    %989 = vmatpush2.bf16.msra.mxu0 %v874
    %990 = vmatprep.subr.bf16.mxu0 %v873
    %991 = vmatpush2.bf16.msra.mxu0 %v872
    %992 = vmatprep.subr.bf16.mxu0 %v871
    %993 = vmatpush2.bf16.msra.mxu0 %v870
    %994 = vmatprep.subr.bf16.mxu0 %v869
    %995 = vmatpush2.bf16.msra.mxu0 %v868
    %996 = vmatprep.subr.bf16.mxu0 %v867
    %997 = vmatpush2.bf16.msra.mxu0 %v866
    %998 = vmatprep.subr.bf16.mxu0 %v865
    %999 = vmatpush2.bf16.msra.mxu0 %v864
    %1000 = vmatprep.subr.bf16.mxu0 %v863
    %1001 = vmatpush2.bf16.msra.mxu0 %v862
    %1002 = vmatprep.subr.bf16.mxu0 %v861
    %1003 = vmatpush2.bf16.msra.mxu0 %v860
    %1004 = vmatprep.mubr.bf16.mxu0 %v573
    %1005 = vmatmul.mubr.bf16.gmra.mxu0 %v572
    %v1006 = vpop.f32.mrf.mxu0
    %v1007 = vadd.f32 %v645, %v1006
    %v1008 = vpop.f32.mrf.mxu0
    %v1009 = vadd.f32 %v649, %v1008
    %v1010 = vpop.f32.mrf.mxu0
    %v1011 = vpop.f32.mrf.mxu0
    %1012 = vdwg.mxu0
    %1013 = vmatprep.subr.bf16.mxu0 %v891
    %1014 = vmatpush1.bf16.msra.mxu0 %v890
    %1015 = vmatprep.subr.bf16.mxu0 %v889
    %1016 = vmatpush1.bf16.msra.mxu0 %v888
    %1017 = vmatprep.subr.bf16.mxu0 %v887
    %1018 = vmatpush1.bf16.msra.mxu0 %v886
    %1019 = vmatprep.subr.bf16.mxu0 %v885
    %1020 = vmatpush1.bf16.msra.mxu0 %v884
    %1021 = vmatprep.subr.bf16.mxu0 %v883
    %1022 = vmatpush1.bf16.msra.mxu0 %v882
    %1023 = vmatprep.subr.bf16.mxu0 %v881
    %1024 = vmatpush1.bf16.msra.mxu0 %v880
    %1025 = vmatprep.subr.bf16.mxu0 %v879
    %1026 = vmatpush1.bf16.msra.mxu0 %v878
    %1027 = vmatprep.subr.bf16.mxu0 %v877
    %1028 = vmatpush1.bf16.msra.mxu0 %v876
    %1029 = vmatprep.subr.bf16.mxu0 %v907
    %1030 = vmatpush2.bf16.msra.mxu0 %v906
    %1031 = vmatprep.subr.bf16.mxu0 %v905
    %1032 = vmatpush2.bf16.msra.mxu0 %v904
    %1033 = vmatprep.subr.bf16.mxu0 %v903
    %1034 = vmatpush2.bf16.msra.mxu0 %v902
    %1035 = vmatprep.subr.bf16.mxu0 %v901
    %1036 = vmatpush2.bf16.msra.mxu0 %v900
    %1037 = vmatprep.subr.bf16.mxu0 %v899
    %1038 = vmatpush2.bf16.msra.mxu0 %v898
    %1039 = vmatprep.subr.bf16.mxu0 %v897
    %1040 = vmatpush2.bf16.msra.mxu0 %v896
    %1041 = vmatprep.subr.bf16.mxu0 %v895
    %1042 = vmatpush2.bf16.msra.mxu0 %v894
    %1043 = vmatprep.subr.bf16.mxu0 %v893
    %1044 = vmatpush2.bf16.msra.mxu0 %v892
    %1045 = vmatprep.mubr.bf16.mxu0 %v575
    %1046 = vmatmul.mubr.bf16.gmra.mxu0 %v574
    %v1047 = vpop.f32.mrf.mxu0
    %v1048 = vadd.f32 %v1007, %v1047
    %v1049 = vpop.f32.mrf.mxu0
    %v1050 = vadd.f32 %v1009, %v1049
    %v1051 = vpop.f32.mrf.mxu0
    %v1052 = vpop.f32.mrf.mxu0
    %1053 = vdwg.mxu0
    %vm1054 = vcmp.gt.f32.partialorder %v1048, 0.0
    %vm1055 = vcmp.gt.f32.partialorder %v1050, 0.0
    %v1056 = vmul.f32 %v1048, 0.2
    %v1057 = vmul.f32 %v1050, 0.2
    %v1058 = vsel %vm1054, %v1048, %v1056
    %v1059 = vsel %vm1055, %v1050, %v1057
    %v1060 = vpack.c.bf16 %v1058, %v1058
    %v1061 = vpack.c.bf16 %v1059, %v1059
    %v1062 = vld [vmem:[#allocation6] sm:$0xf]
    %v1063 = vld [vmem:[#allocation6 + $0x4] sm:$0xf]
    %v1064 = vld [vmem:[#allocation6 + $0x8] sm:$0xf]
    %v1065 = vld [vmem:[#allocation6 + $0xc] sm:$0xf]
    %v1066 = vld [vmem:[#allocation6 + $0x10] sm:$0xf]
    %v1067 = vld [vmem:[#allocation6 + $0x14] sm:$0xf]
    %v1068 = vld [vmem:[#allocation6 + $0x18] sm:$0xf]
    %v1069 = vld [vmem:[#allocation6 + $0x1c] sm:$0xf]
    %v1070 = vld [vmem:[#allocation6 + $0x20] sm:$0xf]
    %v1071 = vld [vmem:[#allocation6 + $0x24] sm:$0xf]
    %v1072 = vld [vmem:[#allocation6 + $0x28] sm:$0xf]
    %v1073 = vld [vmem:[#allocation6 + $0x2c] sm:$0xf]
    %v1074 = vld [vmem:[#allocation6 + $0x30] sm:$0xf]
    %v1075 = vld [vmem:[#allocation6 + $0x34] sm:$0xf]
    %v1076 = vld [vmem:[#allocation6 + $0x38] sm:$0xf]
    %v1077 = vld [vmem:[#allocation6 + $0x3c] sm:$0xf]
    %v1078 = vld [vmem:[#allocation6 + $0x40] sm:$0xf]
    %v1079 = vld [vmem:[#allocation6 + $0x44] sm:$0xf]
    %v1080 = vld [vmem:[#allocation6 + $0x48] sm:$0xf]
    %v1081 = vld [vmem:[#allocation6 + $0x4c] sm:$0xf]
    %v1082 = vld [vmem:[#allocation6 + $0x50] sm:$0xf]
    %v1083 = vld [vmem:[#allocation6 + $0x54] sm:$0xf]
    %v1084 = vld [vmem:[#allocation6 + $0x58] sm:$0xf]
    %v1085 = vld [vmem:[#allocation6 + $0x5c] sm:$0xf]
    %v1086 = vld [vmem:[#allocation6 + $0x60] sm:$0xf]
    %v1087 = vld [vmem:[#allocation6 + $0x64] sm:$0xf]
    %v1088 = vld [vmem:[#allocation6 + $0x68] sm:$0xf]
    %v1089 = vld [vmem:[#allocation6 + $0x6c] sm:$0xf]
    %v1090 = vld [vmem:[#allocation6 + $0x70] sm:$0xf]
    %v1091 = vld [vmem:[#allocation6 + $0x74] sm:$0xf]
    %v1092 = vld [vmem:[#allocation6 + $0x78] sm:$0xf]
    %v1093 = vld [vmem:[#allocation6 + $0x7c] sm:$0xf]
    %v1094 = vld [vmem:[%s6] sm:$0x1]
    %v1096 = vlaneseq
    %v1097 = vshrl.u32 %v1096, 7
    %v1098 = vsub.s32 0, %v1097
    %v1099 = vrot.slane %v1094, %v1098
    %v1133 = vunpack.c.l.b16 %v1062
    %v1134 = vunpack.c.l.b16 %v1063
    %v1135 = vunpack.c.l.b16 %v1064
    %v1136 = vunpack.c.l.b16 %v1065
    %v1137 = vunpack.c.l.b16 %v1066
    %v1138 = vunpack.c.l.b16 %v1067
    %v1139 = vunpack.c.l.b16 %v1068
    %v1140 = vunpack.c.l.b16 %v1069
    %v1141 = vunpack.c.l.b16 %v1070
    %v1142 = vunpack.c.l.b16 %v1071
    %v1143 = vunpack.c.l.b16 %v1072
    %v1144 = vunpack.c.l.b16 %v1073
    %v1145 = vunpack.c.l.b16 %v1074
    %v1146 = vunpack.c.l.b16 %v1075
    %v1147 = vunpack.c.l.b16 %v1076
    %v1148 = vunpack.c.l.b16 %v1077
    %v1149 = vunpack.c.l.b16 %v1078
    %v1150 = vunpack.c.l.b16 %v1079
    %v1151 = vunpack.c.l.b16 %v1080
    %v1152 = vunpack.c.l.b16 %v1081
    %v1153 = vunpack.c.l.b16 %v1082
    %v1154 = vunpack.c.l.b16 %v1083
    %v1155 = vunpack.c.l.b16 %v1084
    %v1156 = vunpack.c.l.b16 %v1085
    %v1157 = vunpack.c.l.b16 %v1086
    %v1158 = vunpack.c.l.b16 %v1087
    %v1159 = vunpack.c.l.b16 %v1088
    %v1160 = vunpack.c.l.b16 %v1089
    %v1161 = vunpack.c.l.b16 %v1090
    %v1162 = vunpack.c.l.b16 %v1091
    %v1163 = vunpack.c.l.b16 %v1092
    %v1164 = vunpack.c.l.b16 %v1093
    %v1165 = vpack.c.b16 %v1134, %v1133
    %v1166 = vpack.c.b16 %v1136, %v1135
    %v1167 = vpack.c.b16 %v1138, %v1137
    %v1168 = vpack.c.b16 %v1140, %v1139
    %v1169 = vpack.c.b16 %v1142, %v1141
    %v1170 = vpack.c.b16 %v1144, %v1143
    %v1171 = vpack.c.b16 %v1146, %v1145
    %v1172 = vpack.c.b16 %v1148, %v1147
    %v1173 = vpack.c.b16 %v1150, %v1149
    %v1174 = vpack.c.b16 %v1152, %v1151
    %v1175 = vpack.c.b16 %v1154, %v1153
    %v1176 = vpack.c.b16 %v1156, %v1155
    %v1177 = vpack.c.b16 %v1158, %v1157
    %v1178 = vpack.c.b16 %v1160, %v1159
    %v1179 = vpack.c.b16 %v1162, %v1161
    %v1180 = vpack.c.b16 %v1164, %v1163
    %1197 = vmatprep.subr.bf16.mxu0 0
    %1198 = vmatpush1.bf16.msra.mxu0 %v1172
    %1199 = vmatprep.subr.bf16.mxu0 0
    %1200 = vmatpush1.bf16.msra.mxu0 %v1171
    %1201 = vmatprep.subr.bf16.mxu0 0
    %1202 = vmatpush1.bf16.msra.mxu0 %v1170
    %1203 = vmatprep.subr.bf16.mxu0 0
    %1204 = vmatpush1.bf16.msra.mxu0 %v1169
    %1205 = vmatprep.subr.bf16.mxu0 0
    %1206 = vmatpush1.bf16.msra.mxu0 %v1168
    %1207 = vmatprep.subr.bf16.mxu0 0
    %1208 = vmatpush1.bf16.msra.mxu0 %v1167
    %1209 = vmatprep.subr.bf16.mxu0 0
    %1210 = vmatpush1.bf16.msra.mxu0 %v1166
    %1211 = vmatprep.subr.bf16.mxu0 0
    %1212 = vmatpush1.bf16.msra.mxu0 %v1165
    %1213 = vmatprep.subr.bf16.mxu0 0
    %1214 = vmatpush2.bf16.msra.mxu0 %v1180
    %1215 = vmatprep.subr.bf16.mxu0 0
    %1216 = vmatpush2.bf16.msra.mxu0 %v1179
    %1217 = vmatprep.subr.bf16.mxu0 0
    %1218 = vmatpush2.bf16.msra.mxu0 %v1178
    %1219 = vmatprep.subr.bf16.mxu0 0
    %1220 = vmatpush2.bf16.msra.mxu0 %v1177
    %1221 = vmatprep.subr.bf16.mxu0 0
    %1222 = vmatpush2.bf16.msra.mxu0 %v1176
    %1223 = vmatprep.subr.bf16.mxu0 0
    %1224 = vmatpush2.bf16.msra.mxu0 %v1175
    %1225 = vmatprep.subr.bf16.mxu0 0
    %1226 = vmatpush2.bf16.msra.mxu0 %v1174
    %1227 = vmatprep.subr.bf16.mxu0 0
    %1228 = vmatpush2.bf16.msra.mxu0 %v1173
    %1229 = vmatprep.mubr.bf16.mxu0 %v1061
    %1230 = vmatmul.mubr.bf16.gmra.mxu0 %v1060
    %v1231 = vpop.f32.mrf.mxu0
    %v1232 = vadd.f32 %v1099, %v1231
    %v1233 = vpop.f32.mrf.mxu0
    %v1234 = vpop.f32.mrf.mxu0
    %v1235 = vpop.f32.mrf.mxu0
    %1236 = vdwg.mxu0
    %v1237 = vxor.u32 %v1232, 2147483648
    %v1238 = vmul.f32 %v1237, 1.442695
    %v1239 = vpow.pop %v1238
    %v1240 = vadd.f32 %v1239, 1.0
    %v1241 = vrcp.pop %v1240
    %v1242 = vmul.f32 1.0, %v1241
    %1243 = vst [vmem:[%s7] sm:$0xff] %v1242
    // Predicated region
    $region42: #{base_discriminator_forward.1} parent=1 // pred_check
      _
    $region43: #{base_discriminator_forward.1} parent=1 // pred_check_branch
      %1245 = sbr.rel (0) target = $region45
    $region44: #{base_discriminator_forward.1} parent=1 // pred_region
      _
    $region45: #{base_discriminator_forward.1} parent=1 // pred_fallthru
      _
    // Predicated region
    $region46: #{base_discriminator_forward.1} parent=1 // pred_check
      _
    $region47: #{base_discriminator_forward.1} parent=1 // pred_check_branch
      %1247 = sbr.rel (0) target = $region49
    $region48: #{base_discriminator_forward.1} parent=1 // pred_region
      _
    $region49: #{base_discriminator_forward.1} parent=1 // pred_fallthru
      _
    %1248 = vsyncpa [#allocation3], 1
    %1249 = vsyncpa [#allocation5], 1

</llo_original>
